<compile_context>
chip_gen: v6e
topology: v6e:2x2x1
jax: 0.10.0
libtpu: 0.0.40
codegen_flags: <defaults>
</compile_context>

<pallas_src>
import functools

import jax
import jax.numpy as jnp
from jax.experimental import pallas as pl
from jax.experimental.pallas import tpu as pltpu


def _round_up(x, m):
    return -(-x // m) * m


# ----------------------------------------------------------------------------
# Fused kernel:
#   ids/mask -> (one-hot gather) tok_emb + pos_emb[0] -> tanh -> mask     (encoder)
#   -> down_proj -> ReLU -> up_proj -> + residual -> dropout -> task head
# All shapes padded to (8,128)-friendly tiles; padding columns stay exactly zero.
# ----------------------------------------------------------------------------
def _fused_kernel(train, inv_keep,
                  task_ref,            # SMEM (1,) int32  (scalar prefetch; drives weight index_maps)
                  ids_ref,             # VMEM (TB, 1)  int32   CLS token id per row
                  mask_ref,            # VMEM (TB, 1)  f32     attention_mask[:, 0] per row
                  tok_ref,             # VMEM (Vp, Hp) f32     token embedding table (padded)
                  pos_ref,             # VMEM (1, Hp)  f32     pos_emb[0] (padded)
                  wd_ref, bd_ref,      # (Hp, Dp) bf16, (1, Dp) f32
                  wu_ref, bu_ref,      # (Dp, Hp) bf16, (1, Hp) f32
                  wh_ref, bh_ref,      # (Hp, Cp) bf16, (1, Cp) f32
                  *rest):
    if train:
        drop_ref, out_ref = rest     # drop_ref: (TB, Hp) f32 keep-mask (0/1)
    else:
        (out_ref,) = rest

    # ---- synthetic CLS encoder, fused in-kernel (one-hot gather on the MXU) ----
    ids = ids_ref[...]                                            # (TB, 1) int32
    tb = ids.shape[0]
    vp = tok_ref.shape[0]
    onehot = (jax.lax.broadcasted_iota(jnp.int32, (tb, vp), 1) == ids).astype(jnp.float32)
    h0 = jnp.dot(onehot, tok_ref[...], preferred_element_type=jnp.float32)   # exact row select
    x = jnp.tanh(h0 + pos_ref[...]) * mask_ref[...]               # (TB, Hp) f32; pad cols stay 0

    # ---- TaskAdapter bottleneck MLP (bf16 MXU operands, f32 accumulation) ----
    down = jnp.dot(x.astype(jnp.bfloat16), wd_ref[...],
                   preferred_element_type=jnp.float32) + bd_ref[...]
    down = jnp.maximum(down, 0.0)                                 # ReLU
    up = jnp.dot(down.astype(jnp.bfloat16), wu_ref[...],
                 preferred_element_type=jnp.float32) + bu_ref[...]
    adapted = x + up                                              # residual add (full f32)

    if train:
        # nn.Dropout(p): keep-mask precomputed in wrapper; hoisted 1/(1-p) scale.
        adapted = adapted * drop_ref[...] * inv_keep

    logits = jnp.dot(adapted.astype(jnp.bfloat16), wh_ref[...],
                     preferred_element_type=jnp.float32) + bh_ref[...]
    out_ref[...] = logits.astype(out_ref.dtype)                   # bf16 lane-dense store


def fused_forward(cls_ids, cls_mask, task_idx,
                  tok_p, pos_p, wd_all, bd_all, wu_all, bu_all, wh_all, bh_all,
                  *, num_classes, train=False, dropout_p=0.3, seed=0):
    """Fused encoder + adapter + head; task selected via scalar prefetch."""
    B = cls_ids.shape[0]
    Vp, Hp = tok_p.shape
    T, _, Dp = wd_all.shape
    Cp = wh_all.shape[2]

    # Batch tiling: >=8 rows (f32 sublanes), tile cap 1024, and aim for >=2 tiles so
    # the "parallel" batch axis is actually sharded across v7x's two TensorCores.
    Bp = _round_up(max(B, 8), 8)
    if Bp <= 8:
        batch_tile = Bp
    else:
        batch_tile = min(1024, _round_up(pl.cdiv(Bp, 2), 8))
    Bp = _round_up(Bp, batch_tile)
    n_tiles = Bp // batch_tile

    # Tiny per-row side inputs (1 int + 1 float per row) — no (Bp, Hp) wrapper pad.
    ids_col = jnp.zeros((Bp, 1), jnp.int32).at[:B, 0].set(cls_ids.astype(jnp.int32))
    mask_col = jnp.zeros((Bp, 1), jnp.float32).at[:B, 0].set(cls_mask.astype(jnp.float32))
    scalars = jnp.asarray([task_idx], jnp.int32)

    p = min(max(float(dropout_p), 0.0), 1.0)
    inv_keep = 1.0 / (1.0 - min(p, 1.0 - 1e-6))   # keep-mask is all-zero if p == 1

    inputs = [scalars, ids_col, mask_col, tok_p, pos_p,
              wd_all, bd_all, wu_all, bu_all, wh_all, bh_all]
    # NOTE (v7x, production sizes): the task-indexed weight blocks are grid-invariant
    # but still double-buffered by default; with very large Hp/Cp consider
    # pipeline_mode=pl.Buffered(1) on the weight specs or splitting Cp over a grid axis.
    in_specs = [
        pl.BlockSpec((batch_tile, 1), lambda i, sc: (i, 0)),          # CLS ids
        pl.BlockSpec((batch_tile, 1), lambda i, sc: (i, 0)),          # CLS mask
        pl.BlockSpec((Vp, Hp), lambda i, sc: (0, 0)),                 # tok_emb (batch-invariant)
        pl.BlockSpec((1, Hp), lambda i, sc: (0, 0)),                  # pos_emb[0]
        pl.BlockSpec((None, Hp, Dp), lambda i, sc: (sc[0], 0, 0)),    # task-indexed weights
        pl.BlockSpec((None, 1, Dp), lambda i, sc: (sc[0], 0, 0)),
        pl.BlockSpec((None, Dp, Hp), lambda i, sc: (sc[0], 0, 0)),
        pl.BlockSpec((None, 1, Hp), lambda i, sc: (sc[0], 0, 0)),
        pl.BlockSpec((None, Hp, Cp), lambda i, sc: (sc[0], 0, 0)),
        pl.BlockSpec((None, 1, Cp), lambda i, sc: (sc[0], 0, 0)),
    ]
    if train:
        keep = jax.random.bernoulli(jax.random.PRNGKey(seed), 1.0 - p,
                                    (Bp, Hp)).astype(jnp.float32)
        inputs.append(keep)
        in_specs.append(pl.BlockSpec((batch_tile, Hp), lambda i, sc: (i, 0)))

    cost = pl.CostEstimate(
        flops=2 * Bp * (Vp * Hp + Hp * Dp + Dp * Hp + Hp * Cp),
        transcendentals=Bp * Hp,   # tanh
        bytes_accessed=(Bp * (4 + 4)                      # ids + mask
                        + Vp * Hp * 4 + Hp * 4            # tok_emb + pos row
                        + (Hp * Dp + Dp * Hp + Hp * Cp) * 2
                        + (Dp + Hp + Cp) * 4
                        + Bp * Cp * 2
                        + (Bp * Hp * 4 if train else 0)),
    )

    kernel = functools.partial(_fused_kernel, train, inv_keep)

    out = pl.pallas_call(
        kernel,
        out_shape=jax.ShapeDtypeStruct((Bp, Cp), jnp.bfloat16),
        grid_spec=pltpu.PrefetchScalarGridSpec(
            num_scalar_prefetch=1,
            grid=(n_tiles,),
            in_specs=in_specs,
            out_specs=pl.BlockSpec((batch_tile, Cp), lambda i, sc: (i, 0)),
        ),
        compiler_params=pltpu.CompilerParams(
            dimension_semantics=("parallel",),   # batch tiles across v7x TensorCores
        ),
        cost_estimate=cost,
    )(*inputs)

    return out[:B, :num_classes].astype(jnp.float32)


# ----------------------------------------------------------------------------
# Model wrapper (parameter setup is plain-JAX glue; everything in forward runs
# inside the single Pallas kernel).
# ----------------------------------------------------------------------------
class AdapterMultiTaskTransformerPallas:
    def __init__(self, num_classes_dict, hidden_size=32, adapter_dim=128,
                 vocab_size=64, max_seq=16, key=jax.random.PRNGKey(0)):
        self.hidden_size = hidden_size
        self.adapter_dim = adapter_dim
        self.num_classes_dict = dict(num_classes_dict)
        self.task_names = list(self.num_classes_dict.keys())
        self.task_index = {t: i for i, t in enumerate(self.task_names)}

        ks = iter(jax.random.split(key, 64))

        def init(shape, scale=0.02):
            return (scale * jax.random.normal(next(ks), shape)).astype(jnp.float32)

        # TODO(synk): synthetic embedding encoder stands in for the pretrained HF encoder.
        self.tok_emb = init((vocab_size, hidden_size), 1.0)
        self.pos_emb = init((max_seq, hidden_size), 1.0)

        # original (unpadded, f32) parameters, used by the reference path
        self.adapters = {}
        self.task_heads = {}
        for task, n_cls in self.num_classes_dict.items():
            self.adapters[task] = {
                "wd": init((hidden_size, adapter_dim)),
                "bd": init((adapter_dim,)),
                "wu": init((adapter_dim, hidden_size)),
                "bu": init((hidden_size,)),
            }
            self.task_heads[task] = {
                "wh": init((hidden_size, n_cls)),
                "bh": init((n_cls,)),
            }

        # padded, stacked, kernel-ready parameters.
        # K/N padded to 128 (native tile on v5e; on v6e/v7x co-padding Dp/Cp to 256
        # would fill the 2x256x256 MXU, but this workload is DMA-bound at these sizes).
        H, D = hidden_size, adapter_dim
        Hp = _round_up(H, 128)
        Dp = _round_up(D, 128)
        Cp = _round_up(max(self.num_classes_dict.values()), 128)
        Vp = _round_up(vocab_size, 128)
        self.Hp, self.Dp, self.Cp, self.Vp = Hp, Dp, Cp, Vp

        def pad_mat(m, r, c):
            return jnp.zeros((r, c), jnp.float32).at[:m.shape[0], :m.shape[1]].set(m)

        def pad_vec(v, n):
            return jnp.zeros((1, n), jnp.float32).at[0, :v.shape[0]].set(v)

        # padded encoder tables (tiny; VMEM-resident inside the kernel)
        self.tok_p = pad_mat(self.tok_emb, Vp, Hp)
        self.pos0_p = pad_vec(self.pos_emb[0], Hp)

        self.wd_all = jnp.stack(
            [pad_mat(self.adapters[t]["wd"], Hp, Dp) for t in self.task_names]
        ).astype(jnp.bfloat16)
        self.bd_all = jnp.stack(
            [pad_vec(self.adapters[t]["bd"], Dp) for t in self.task_names])
        self.wu_all = jnp.stack(
            [pad_mat(self.adapters[t]["wu"], Dp, Hp) for t in self.task_names]
        ).astype(jnp.bfloat16)
        self.bu_all = jnp.stack(
            [pad_vec(self.adapters[t]["bu"], Hp) for t in self.task_names])
        self.wh_all = jnp.stack(
            [pad_mat(self.task_heads[t]["wh"], Hp, Cp) for t in self.task_names]
        ).astype(jnp.bfloat16)
        self.bh_all = jnp.stack(
            [pad_vec(self.task_heads[t]["bh"], Cp) for t in self.task_names])

    def __call__(self, input_ids, attention_mask, task, *, train=False, seed=0):
        return fused_forward(
            input_ids[:, 0], attention_mask[:, 0], self.task_index[task],
            self.tok_p, self.pos0_p,
            self.wd_all, self.bd_all, self.wu_all, self.bu_all,
            self.wh_all, self.bh_all,
            num_classes=self.num_classes_dict[task],
            train=train, dropout_p=0.3, seed=seed)

    # plain-JAX reference (eval mode); mirrors the kernel's bf16 MXU operands
    # with f32 accumulation.
    def _encode_cls(self, input_ids, attention_mask):
        h0 = self.tok_emb[input_ids[:, 0]] + self.pos_emb[0]
        return jnp.tanh(h0) * attention_mask[:, 0, None].astype(jnp.float32)

    def reference(self, input_ids, attention_mask, task):
        pooled = self._encode_cls(input_ids, attention_mask)
        a = self.adapters[task]
        h = self.task_heads[task]
        bf = jnp.bfloat16
        down = jnp.maximum(
            jnp.dot(pooled.astype(bf), a["wd"].astype(bf),
                    preferred_element_type=jnp.float32) + a["bd"], 0.0)
        up = jnp.dot(down.astype(bf), a["wu"].astype(bf),
                     preferred_element_type=jnp.float32) + a["bu"]
        adapted = pooled + up
        return jnp.dot(adapted.astype(bf), h["wh"].astype(bf),
                       preferred_element_type=jnp.float32) + h["bh"]


# ----------------------------------------------------------------------------
if __name__ == "__main__":
    key = jax.random.PRNGKey(0)
    k_ids, k_model = jax.random.split(key)

    B, S, H = 2, 8, 32
    num_classes = {"narrative_classification": 8, "entity_framing": 16}

    model = AdapterMultiTaskTransformerPallas(
        num_classes, hidden_size=H, adapter_dim=128, vocab_size=64,
        max_seq=S, key=k_model)

    input_ids = jax.random.randint(k_ids, (B, S), 0, 64, dtype=jnp.int32)
    attention_mask = jnp.ones((B, S), dtype=jnp.int32)

    ok = True
    for task in num_classes:
        logits = model(input_ids, attention_mask, task, train=False)
        jax.block_until_ready(logits)
        ref = model.reference(input_ids, attention_mask, task)
        ok &= (logits.shape == (B, num_classes[task]))
        ok &= bool(jnp.allclose(logits, ref, atol=3e-3, rtol=3e-3))

    # exercise the dropout (train) path once
    tr = model(input_ids, attention_mask, "entity_framing", train=True, seed=123)
    jax.block_until_ready(tr)
    ok &= (tr.shape == (B, num_classes["entity_framing"]))
    ok &= bool(jnp.all(jnp.isfinite(tr)))

    if not ok:
        raise SystemExit("MISMATCH")
    print("KERNEL_OK")
</pallas_src>

<mosaic_0001>
module attributes {stable_mosaic.version = 11 : i64} {
  func.func @_fused_kernel(%arg0: i32, %arg1: memref<1xi32, #tpu.memory_space<smem>>, %arg2: memref<8x1xi32, #tpu.memory_space<vmem>>, %arg3: memref<8x1xf32, #tpu.memory_space<vmem>>, %arg4: memref<128x128xf32, #tpu.memory_space<vmem>>, %arg5: memref<1x128xf32, #tpu.memory_space<vmem>>, %arg6: memref<1x128x128xbf16, #tpu.memory_space<vmem>>, %arg7: memref<1x1x128xf32, #tpu.memory_space<vmem>>, %arg8: memref<1x128x128xbf16, #tpu.memory_space<vmem>>, %arg9: memref<1x1x128xf32, #tpu.memory_space<vmem>>, %arg10: memref<1x128x128xbf16, #tpu.memory_space<vmem>>, %arg11: memref<1x1x128xf32, #tpu.memory_space<vmem>>, %arg12: memref<8x128xbf16, #tpu.memory_space<vmem>>) attributes {dimension_semantics = [#tpu.dimension_semantics<parallel>], iteration_bounds = array<i64: 1>, scalar_prefetch = 1 : i64, scratch_operands = 0 : i64, tpu.core_type = #tpu.core_type<tc>, window_params = [{transform_indices = @transform_0, window_bounds = array<i64: 8, 1>}, {transform_indices = @transform_1, window_bounds = array<i64: 8, 1>}, {pipeline_mode = #tpu.pipeline_mode<synchronous>, transform_indices = @transform_2, window_bounds = array<i64: 128, 128>}, {pipeline_mode = #tpu.pipeline_mode<synchronous>, transform_indices = @transform_3, window_bounds = array<i64: 1, 128>}, {transform_indices = @transform_4, window_bounds = array<i64: 1, 128, 128>}, {transform_indices = @transform_5, window_bounds = array<i64: 1, 1, 128>}, {transform_indices = @transform_6, window_bounds = array<i64: 1, 128, 128>}, {transform_indices = @transform_7, window_bounds = array<i64: 1, 1, 128>}, {transform_indices = @transform_8, window_bounds = array<i64: 1, 128, 128>}, {transform_indices = @transform_9, window_bounds = array<i64: 1, 1, 128>}, {transform_indices = @transform_10, window_bounds = array<i64: 8, 128>}]} {
    %c0 = arith.constant 0 : index
    %c0_0 = arith.constant 0 : index
    %0 = vector.load %arg2[%c0, %c0_0] : memref<8x1xi32, #tpu.memory_space<vmem>>, vector<8x1xi32>
    %1 = tpu.iota {dimensions = array<i32: 1>} : vector<8x128xi32>
    %2 = vector.broadcast %0 : vector<8x1xi32> to vector<8x128xi32>
    %3 = arith.cmpi eq, %1, %2 : vector<8x128xi32>
    %4 = arith.extui %3 : vector<8x128xi1> to vector<8x128xi32>
    %5 = arith.sitofp %4 : vector<8x128xi32> to vector<8x128xf32>
    %c0_1 = arith.constant 0 : index
    %c0_2 = arith.constant 0 : index
    %6 = vector.load %arg4[%c0_1, %c0_2] : memref<128x128xf32, #tpu.memory_space<vmem>>, vector<128x128xf32>
    %cst = arith.constant dense<0.000000e+00> : vector<8x128xf32>
    %7 = tpu.matmul %5, %6, %cst {dimension_numbers = #tpu.dot_dimension_numbers<[1], [0], [0], [1], [0, 0, 1, 1], [], []>} : vector<8x128xf32>, vector<128x128xf32>, vector<8x128xf32> -> vector<8x128xf32>
    %c0_3 = arith.constant 0 : index
    %c0_4 = arith.constant 0 : index
    %8 = vector.load %arg5[%c0_3, %c0_4] : memref<1x128xf32, #tpu.memory_space<vmem>>, vector<1x128xf32>
    %9 = vector.broadcast %8 : vector<1x128xf32> to vector<8x128xf32>
    %10 = arith.addf %7, %9 : vector<8x128xf32>
    %11 = math.tanh %10 : vector<8x128xf32>
    %c0_5 = arith.constant 0 : index
    %c0_6 = arith.constant 0 : index
    %12 = vector.load %arg3[%c0_5, %c0_6] : memref<8x1xf32, #tpu.memory_space<vmem>>, vector<8x1xf32>
    %13 = vector.broadcast %12 : vector<8x1xf32> to vector<8x128xf32>
    %14 = arith.mulf %11, %13 : vector<8x128xf32>
    %15 = arith.truncf %14 : vector<8x128xf32> to vector<8x128xbf16>
    %c0_7 = arith.constant 0 : index
    %c0_8 = arith.constant 0 : index
    %c0_9 = arith.constant 0 : index
    %16 = vector.load %arg6[%c0_7, %c0_8, %c0_9] : memref<1x128x128xbf16, #tpu.memory_space<vmem>>, vector<1x128x128xbf16>
    %17 = vector.shape_cast %16 : vector<1x128x128xbf16> to vector<128x128xbf16>
    %cst_10 = arith.constant dense<0.000000e+00> : vector<8x128xf32>
    %18 = tpu.matmul %15, %17, %cst_10 {dimension_numbers = #tpu.dot_dimension_numbers<[1], [0], [0], [1], [0, 0, 1, 1], [], []>} : vector<8x128xbf16>, vector<128x128xbf16>, vector<8x128xf32> -> vector<8x128xf32>
    %c0_11 = arith.constant 0 : index
    %c0_12 = arith.constant 0 : index
    %c0_13 = arith.constant 0 : index
    %19 = vector.load %arg7[%c0_11, %c0_12, %c0_13] : memref<1x1x128xf32, #tpu.memory_space<vmem>>, vector<1x1x128xf32>
    %20 = vector.shape_cast %19 : vector<1x1x128xf32> to vector<1x128xf32>
    %21 = vector.broadcast %20 : vector<1x128xf32> to vector<8x128xf32>
    %22 = arith.addf %18, %21 : vector<8x128xf32>
    %cst_14 = arith.constant 0.000000e+00 : f32
    %23 = vector.broadcast %cst_14 : f32 to vector<8x128xf32>
    %24 = arith.maximumf %22, %23 : vector<8x128xf32>
    %25 = arith.truncf %24 : vector<8x128xf32> to vector<8x128xbf16>
    %c0_15 = arith.constant 0 : index
    %c0_16 = arith.constant 0 : index
    %c0_17 = arith.constant 0 : index
    %26 = vector.load %arg8[%c0_15, %c0_16, %c0_17] : memref<1x128x128xbf16, #tpu.memory_space<vmem>>, vector<1x128x128xbf16>
    %27 = vector.shape_cast %26 : vector<1x128x128xbf16> to vector<128x128xbf16>
    %cst_18 = arith.constant dense<0.000000e+00> : vector<8x128xf32>
    %28 = tpu.matmul %25, %27, %cst_18 {dimension_numbers = #tpu.dot_dimension_numbers<[1], [0], [0], [1], [0, 0, 1, 1], [], []>} : vector<8x128xbf16>, vector<128x128xbf16>, vector<8x128xf32> -> vector<8x128xf32>
    %c0_19 = arith.constant 0 : index
    %c0_20 = arith.constant 0 : index
    %c0_21 = arith.constant 0 : index
    %29 = vector.load %arg9[%c0_19, %c0_20, %c0_21] : memref<1x1x128xf32, #tpu.memory_space<vmem>>, vector<1x1x128xf32>
    %30 = vector.shape_cast %29 : vector<1x1x128xf32> to vector<1x128xf32>
    %31 = vector.broadcast %30 : vector<1x128xf32> to vector<8x128xf32>
    %32 = arith.addf %28, %31 : vector<8x128xf32>
    %33 = arith.addf %14, %32 : vector<8x128xf32>
    %34 = arith.truncf %33 : vector<8x128xf32> to vector<8x128xbf16>
    %c0_22 = arith.constant 0 : index
    %c0_23 = arith.constant 0 : index
    %c0_24 = arith.constant 0 : index
    %35 = vector.load %arg10[%c0_22, %c0_23, %c0_24] : memref<1x128x128xbf16, #tpu.memory_space<vmem>>, vector<1x128x128xbf16>
    %36 = vector.shape_cast %35 : vector<1x128x128xbf16> to vector<128x128xbf16>
    %cst_25 = arith.constant dense<0.000000e+00> : vector<8x128xf32>
    %37 = tpu.matmul %34, %36, %cst_25 {dimension_numbers = #tpu.dot_dimension_numbers<[1], [0], [0], [1], [0, 0, 1, 1], [], []>} : vector<8x128xbf16>, vector<128x128xbf16>, vector<8x128xf32> -> vector<8x128xf32>
    %c0_26 = arith.constant 0 : index
    %c0_27 = arith.constant 0 : index
    %c0_28 = arith.constant 0 : index
    %38 = vector.load %arg11[%c0_26, %c0_27, %c0_28] : memref<1x1x128xf32, #tpu.memory_space<vmem>>, vector<1x1x128xf32>
    %39 = vector.shape_cast %38 : vector<1x1x128xf32> to vector<1x128xf32>
    %40 = vector.broadcast %39 : vector<1x128xf32> to vector<8x128xf32>
    %41 = arith.addf %37, %40 : vector<8x128xf32>
    %42 = arith.truncf %41 : vector<8x128xf32> to vector<8x128xbf16>
    %c0_29 = arith.constant 0 : index
    %c0_30 = arith.constant 0 : index
    %43 = vector.load %arg12[%c0_29, %c0_30] : memref<8x128xbf16, #tpu.memory_space<vmem>>, vector<8x128xbf16>
    tpu.vector_store %arg12[%c0_29, %c0_30], %42 {strides = array<i32>} : memref<8x128xbf16, #tpu.memory_space<vmem>>, vector<8x128xbf16>,
    return
  }
  func.func @transform_0(%arg0: i32, %arg1: memref<1xi32, #tpu.memory_space<smem>>) -> (i32, i32) {
    %c0_i32 = arith.constant 0 : i32
    %c0_i32_0 = arith.constant 0 : i32
    return %arg0, %c0_i32 : i32, i32
  }
  func.func @transform_1(%arg0: i32, %arg1: memref<1xi32, #tpu.memory_space<smem>>) -> (i32, i32) {
    %c0_i32 = arith.constant 0 : i32
    %c0_i32_0 = arith.constant 0 : i32
    return %arg0, %c0_i32 : i32, i32
  }
  func.func @transform_2(%arg0: i32, %arg1: memref<1xi32, #tpu.memory_space<smem>>) -> (i32, i32) {
    %c0_i32 = arith.constant 0 : i32
    %c0_i32_0 = arith.constant 0 : i32
    %c0_i32_1 = arith.constant 0 : i32
    return %c0_i32, %c0_i32_0 : i32, i32
  }
  func.func @transform_3(%arg0: i32, %arg1: memref<1xi32, #tpu.memory_space<smem>>) -> (i32, i32) {
    %c0_i32 = arith.constant 0 : i32
    %c0_i32_0 = arith.constant 0 : i32
    %c0_i32_1 = arith.constant 0 : i32
    return %c0_i32, %c0_i32_0 : i32, i32
  }
  func.func @transform_4(%arg0: i32, %arg1: memref<1xi32, #tpu.memory_space<smem>>) -> (i32, i32, i32) {
    %c0 = arith.constant 0 : index
    %0 = memref.load %arg1[%c0] : memref<1xi32, #tpu.memory_space<smem>>
    %c0_i32 = arith.constant 0 : i32
    %c0_i32_0 = arith.constant 0 : i32
    %c0_i32_1 = arith.constant 0 : i32
    return %0, %c0_i32, %c0_i32_0 : i32, i32, i32
  }
  func.func @transform_5(%arg0: i32, %arg1: memref<1xi32, #tpu.memory_space<smem>>) -> (i32, i32, i32) {
    %c0 = arith.constant 0 : index
    %0 = memref.load %arg1[%c0] : memref<1xi32, #tpu.memory_space<smem>>
    %c0_i32 = arith.constant 0 : i32
    %c0_i32_0 = arith.constant 0 : i32
    %c0_i32_1 = arith.constant 0 : i32
    return %0, %c0_i32, %c0_i32_0 : i32, i32, i32
  }
  func.func @transform_6(%arg0: i32, %arg1: memref<1xi32, #tpu.memory_space<smem>>) -> (i32, i32, i32) {
    %c0 = arith.constant 0 : index
    %0 = memref.load %arg1[%c0] : memref<1xi32, #tpu.memory_space<smem>>
    %c0_i32 = arith.constant 0 : i32
    %c0_i32_0 = arith.constant 0 : i32
    %c0_i32_1 = arith.constant 0 : i32
    return %0, %c0_i32, %c0_i32_0 : i32, i32, i32
  }
  func.func @transform_7(%arg0: i32, %arg1: memref<1xi32, #tpu.memory_space<smem>>) -> (i32, i32, i32) {
    %c0 = arith.constant 0 : index
    %0 = memref.load %arg1[%c0] : memref<1xi32, #tpu.memory_space<smem>>
    %c0_i32 = arith.constant 0 : i32
    %c0_i32_0 = arith.constant 0 : i32
    %c0_i32_1 = arith.constant 0 : i32
    return %0, %c0_i32, %c0_i32_0 : i32, i32, i32
  }
  func.func @transform_8(%arg0: i32, %arg1: memref<1xi32, #tpu.memory_space<smem>>) -> (i32, i32, i32) {
    %c0 = arith.constant 0 : index
    %0 = memref.load %arg1[%c0] : memref<1xi32, #tpu.memory_space<smem>>
    %c0_i32 = arith.constant 0 : i32
    %c0_i32_0 = arith.constant 0 : i32
    %c0_i32_1 = arith.constant 0 : i32
    return %0, %c0_i32, %c0_i32_0 : i32, i32, i32
  }
  func.func @transform_9(%arg0: i32, %arg1: memref<1xi32, #tpu.memory_space<smem>>) -> (i32, i32, i32) {
    %c0 = arith.constant 0 : index
    %0 = memref.load %arg1[%c0] : memref<1xi32, #tpu.memory_space<smem>>
    %c0_i32 = arith.constant 0 : i32
    %c0_i32_0 = arith.constant 0 : i32
    %c0_i32_1 = arith.constant 0 : i32
    return %0, %c0_i32, %c0_i32_0 : i32, i32, i32
  }
  func.func @transform_10(%arg0: i32, %arg1: memref<1xi32, #tpu.memory_space<smem>>) -> (i32, i32) {
    %c0_i32 = arith.constant 0 : i32
    %c0_i32_0 = arith.constant 0 : i32
    return %arg0, %c0_i32 : i32, i32
  }
}

</mosaic_0001>

<llo_original>
// kernel: tpu_custom_call.1
$region0: #{tpu_custom_call.1}
  #allocation0 [shape = 'u32[]', space=smem, size = 0x4, offset = 0x4, fixed_abs, tag = 'smem constant byte address 0x4 - core index']
  #allocation1 [shape = 'u32[144,128]{1,0:T(1,128)}', space=vmem, size = 0x12000, scoped, tag = 'internal scratch']
  #allocation2 [shape = 's32[1]{0}', space=sflag, size = 0x4, scoped, tag = 'scoped memory for tpu_custom_call.1']
  #allocation3 [shape = 's32[1]{0:T(128)S(6)}', space=smem, size = 0x200, scoped, tag = 'prefetched SMEM operand 0']
  %s0 = inlined_call_operand.<no memory space> [shape: s32[1], index: 0, kind: input, shape index: {}]
  %s1 = inlined_call_operand.vmem [shape: s32[8,1], index: 1, kind: input, shape index: {}]
  %s2 = inlined_call_operand.vmem [shape: f32[8,1], index: 2, kind: input, shape index: {}]
  %s3 = inlined_call_operand.hbm [shape: f32[128,128], index: 3, kind: input, shape index: {}]
  %s4 = inlined_call_operand.vmem [shape: f32[1,128], index: 4, kind: input, shape index: {}]
  %s5 = inlined_call_operand.hbm [shape: bf16[2,128,128], index: 5, kind: input, shape index: {}]
  %s6 = inlined_call_operand.vmem [shape: f32[2,1,128], index: 6, kind: input, shape index: {}]
  %s7 = inlined_call_operand.hbm [shape: bf16[2,128,128], index: 7, kind: input, shape index: {}]
  %s8 = inlined_call_operand.vmem [shape: f32[2,1,128], index: 8, kind: input, shape index: {}]
  %s9 = inlined_call_operand.hbm [shape: bf16[2,128,128], index: 9, kind: input, shape index: {}]
  %s10 = inlined_call_operand.vmem [shape: f32[2,1,128], index: 10, kind: input, shape index: {}]
  %s11 = inlined_call_operand.hbm [shape: bf16[8,128], index: 11, kind: output, shape index: {}]
  %s12 = sld [smem:[#allocation0]]
  $region66: #{tpu_custom_call.1} parent=0
    _
  %s14 = ssub.s32 1, %s12
  %s15 = scalar_select 0, %s14, %s12
  %16 = sst [smem:[#allocation3]] %s0
  $region1: #{tpu_custom_call.1} parent=0
    #allocation4 [shape = 'u8[65536]{0}', space=vmem, size = 0x10000, scoped, tag = 'input window, operand 3, single buffered']
    #allocation5 [shape = 's32[1]{0}', space=sflag, size = 0x4, scoped, tag = 'scoped memory for tpu_custom_call.1']
    #allocation6 [shape = 's32[1]{0}', space=sflag, size = 0x4, scoped, tag = 'scoped memory for tpu_custom_call.1']
    #allocation7 [shape = 'u8[32768]{0}', space=vmem, size = 0x8000, scoped, tag = 'input window, operand 5, single buffered']
    #allocation8 [shape = 's32[1]{0}', space=sflag, size = 0x4, scoped, tag = 'scoped memory for tpu_custom_call.1']
    #allocation9 [shape = 'u8[32768]{0}', space=vmem, size = 0x8000, scoped, tag = 'input window, operand 7, single buffered']
    #allocation10 [shape = 'u8[32768]{0}', space=vmem, size = 0x8000, scoped, tag = 'input window, operand 9, single buffered']
    #allocation11 [shape = 's32[1]{0}', space=sflag, size = 0x4, scoped, tag = 'scoped memory for tpu_custom_call.1']
    #allocation12 [shape = 'u8[2048]{0}', space=vmem, size = 0x800, scoped, tag = 'output window, operand 0, single buffered']
    %17 = vsyncpa [#allocation5], 0
    %18 = vsyncpa [#allocation8], 0
    %19 = vsyncpa [#allocation11], 0
    %20 = vsyncpa [#allocation6], 0
    // Predicated region
    $region2: #{tpu_custom_call.1} parent=1 // pred_check
      _
    $region3: #{tpu_custom_call.1} parent=1 // pred_check_branch
      %22 = sbr.rel (0) target = $region5
    $region4: #{tpu_custom_call.1} parent=1 // pred_region
      _
    $region5: #{tpu_custom_call.1} parent=1 // pred_fallthru
      _
    // Predicated region
    $region6: #{tpu_custom_call.1} parent=1 // pred_check
      _
    $region7: #{tpu_custom_call.1} parent=1 // pred_check_branch
      %24 = sbr.rel (0) target = $region9
    $region8: #{tpu_custom_call.1} parent=1 // pred_region
      _
    $region9: #{tpu_custom_call.1} parent=1 // pred_fallthru
      _
    // Predicated region
    $region10: #{tpu_custom_call.1} parent=1 // pred_check
      _
    $region11: #{tpu_custom_call.1} parent=1 // pred_check_branch
      %26 = sbr.rel (0) target = $region13
    $region12: #{tpu_custom_call.1} parent=1 // pred_region
      %s28 = ssub.s32 2048, 2048
      %29 = vsyncadd [#allocation5], %s28
      %s30 = sshll.u32 [#allocation4], 4
      %s31 = int_to_ptr.vmem [resolvable:$true] %s30
      %36 = dma.hbm_to_vmem [thread:$0]  %s3, 2048, %s31, [#allocation5], 128, 128, 8
    $region13: #{tpu_custom_call.1} parent=1 // pred_fallthru
      _
    // Predicated region
    $region14: #{tpu_custom_call.1} parent=1 // pred_check
      _
    $region15: #{tpu_custom_call.1} parent=1 // pred_check_branch
      %38 = sbr.rel (0) target = $region17
    $region16: #{tpu_custom_call.1} parent=1 // pred_region
      _
    $region17: #{tpu_custom_call.1} parent=1 // pred_fallthru
      _
    // Predicated region
    $region18: #{tpu_custom_call.1} parent=1 // pred_check
      _
    $region19: #{tpu_custom_call.1} parent=1 // pred_check_branch
      %40 = sbr.rel (0) target = $region21
    $region20: #{tpu_custom_call.1} parent=1 // pred_region
      %s41 = sld [smem:[#allocation3]]
      %s43 = ssub.s32 1024, 1024
      %44 = vsyncadd [#allocation8], %s43
      %s45 = smul.addr %s41, 16
      %s46 = smul.addr %s45, 64
      %s47 = scalar_lea.hbm %s5, %s46
      %s48 = sshll.u32 [#allocation7], 4
      %s49 = int_to_ptr.vmem [resolvable:$true] %s48
      %54 = dma.hbm_to_vmem [thread:$0]  %s47, 1024, %s49, [#allocation8], 64, 64, 4
    $region21: #{tpu_custom_call.1} parent=1 // pred_fallthru
      _
    // Predicated region
    $region22: #{tpu_custom_call.1} parent=1 // pred_check
      _
    $region23: #{tpu_custom_call.1} parent=1 // pred_check_branch
      %56 = sbr.rel (0) target = $region25
    $region24: #{tpu_custom_call.1} parent=1 // pred_region
      %s57 = sld [smem:[#allocation3]]
      %p58 = scmp.lt.s32.totalorder %s57, 1
      %s59 = scalar_select %p58, %s57, 1
      %s60 = scalar_lea.vmem %s6, %s59
      %s61 = sld [smem:[#allocation3]]
    $region25: #{tpu_custom_call.1} parent=1 // pred_fallthru
      _
    // Predicated region
    $region26: #{tpu_custom_call.1} parent=1 // pred_check
      _
    $region27: #{tpu_custom_call.1} parent=1 // pred_check_branch
      %63 = sbr.rel (0) target = $region29
    $region28: #{tpu_custom_call.1} parent=1 // pred_region
      %s64 = sld [smem:[#allocation3]]
      %s66 = ssub.s32 1024, 1024
      %67 = vsyncadd [#allocation8], %s66
      %s68 = smul.addr %s64, 16
      %s69 = smul.addr %s68, 64
      %s70 = scalar_lea.hbm %s7, %s69
      %s71 = sshll.u32 [#allocation9], 4
      %s72 = int_to_ptr.vmem [resolvable:$true] %s71
      %77 = dma.hbm_to_vmem [thread:$0]  %s70, 1024, %s72, [#allocation8], 64, 64, 4
    $region29: #{tpu_custom_call.1} parent=1 // pred_fallthru
      _
    // Predicated region
    $region30: #{tpu_custom_call.1} parent=1 // pred_check
      _
    $region31: #{tpu_custom_call.1} parent=1 // pred_check_branch
      %79 = sbr.rel (0) target = $region33
    $region32: #{tpu_custom_call.1} parent=1 // pred_region
      %s80 = sld [smem:[#allocation3]]
      %p81 = scmp.lt.s32.totalorder %s80, 1
      %s82 = scalar_select %p81, %s80, 1
      %s83 = scalar_lea.vmem %s8, %s82
      %s84 = sld [smem:[#allocation3]]
    $region33: #{tpu_custom_call.1} parent=1 // pred_fallthru
      _
    // Predicated region
    $region34: #{tpu_custom_call.1} parent=1 // pred_check
      _
    $region35: #{tpu_custom_call.1} parent=1 // pred_check_branch
      %86 = sbr.rel (0) target = $region37
    $region36: #{tpu_custom_call.1} parent=1 // pred_region
      %s87 = sld [smem:[#allocation3]]
      %s89 = ssub.s32 1024, 1024
      %90 = vsyncadd [#allocation11], %s89
      %s91 = smul.addr %s87, 16
      %s92 = smul.addr %s91, 64
      %s93 = scalar_lea.hbm %s9, %s92
      %s94 = sshll.u32 [#allocation10], 4
      %s95 = int_to_ptr.vmem [resolvable:$true] %s94
      %100 = dma.hbm_to_vmem [thread:$0]  %s93, 1024, %s95, [#allocation11], 64, 64, 4
    $region37: #{tpu_custom_call.1} parent=1 // pred_fallthru
      _
    // Predicated region
    $region38: #{tpu_custom_call.1} parent=1 // pred_check
      _
    $region39: #{tpu_custom_call.1} parent=1 // pred_check_branch
      %102 = sbr.rel (0) target = $region41
    $region40: #{tpu_custom_call.1} parent=1 // pred_region
      %s103 = sld [smem:[#allocation3]]
      %p104 = scmp.lt.s32.totalorder %s103, 1
      %s105 = scalar_select %p104, %s103, 1
      %s106 = scalar_lea.vmem %s10, %s105
      %s107 = sld [smem:[#allocation3]]
    $region41: #{tpu_custom_call.1} parent=1 // pred_fallthru
      _
    // Predicated region
    $region42: #{tpu_custom_call.1} parent=1 // pred_check
      _
    $region43: #{tpu_custom_call.1} parent=1 // pred_check_branch
      %109 = sbr.rel (0) target = $region45
    $region44: #{tpu_custom_call.1} parent=1 // pred_region
      %110 = dma.done [#allocation5], 2048
    $region45: #{tpu_custom_call.1} parent=1 // pred_fallthru
      _
    // Predicated region
    $region46: #{tpu_custom_call.1} parent=1 // pred_check
      _
    $region47: #{tpu_custom_call.1} parent=1 // pred_check_branch
      %112 = sbr.rel (0) target = $region49
    $region48: #{tpu_custom_call.1} parent=1 // pred_region
      %113 = dma.done [#allocation8], 1024
    $region49: #{tpu_custom_call.1} parent=1 // pred_fallthru
      _
    // Predicated region
    $region50: #{tpu_custom_call.1} parent=1 // pred_check
      _
    $region51: #{tpu_custom_call.1} parent=1 // pred_check_branch
      %115 = sbr.rel (0) target = $region53
    $region52: #{tpu_custom_call.1} parent=1 // pred_region
      %116 = dma.done [#allocation8], 1024
    $region53: #{tpu_custom_call.1} parent=1 // pred_fallthru
      _
    // Predicated region
    $region54: #{tpu_custom_call.1} parent=1 // pred_check
      _
    $region55: #{tpu_custom_call.1} parent=1 // pred_check_branch
      %118 = sbr.rel (0) target = $region57
    $region56: #{tpu_custom_call.1} parent=1 // pred_region
      %119 = dma.done [#allocation11], 1024
    $region57: #{tpu_custom_call.1} parent=1 // pred_fallthru
      _
    %s120 = sld [smem:[#allocation3]]
    %p121 = scmp.lt.s32.totalorder %s120, 1
    %s122 = scalar_select %p121, %s120, 1
    %s123 = scalar_lea.vmem %s6, %s122
    %s124 = sld [smem:[#allocation3]]
    %p125 = scmp.lt.s32.totalorder %s124, 1
    %s126 = scalar_select %p125, %s124, 1
    %s127 = scalar_lea.vmem %s8, %s126
    %s128 = sld [smem:[#allocation3]]
    %p129 = scmp.lt.s32.totalorder %s128, 1
    %s130 = scalar_select %p129, %s128, 1
    %s131 = scalar_lea.vmem %s10, %s130
    %s132 = sld [smem:[#allocation3]]
    %s133 = sld [smem:[#allocation3]]
    %p134 = scmp.lt.s32.totalorder %s133, 1
    %s135 = scalar_select %p134, %s133, 1
    %s136 = scalar_lea.vmem %s6, %s135
    %s137 = sld [smem:[#allocation3]]
    %s138 = sld [smem:[#allocation3]]
    %s139 = sld [smem:[#allocation3]]
    %p140 = scmp.lt.s32.totalorder %s139, 1
    %s141 = scalar_select %p140, %s139, 1
    %s142 = scalar_lea.vmem %s8, %s141
    %s143 = sld [smem:[#allocation3]]
    %s144 = sld [smem:[#allocation3]]
    %s145 = sld [smem:[#allocation3]]
    %p146 = scmp.lt.s32.totalorder %s145, 1
    %s147 = scalar_select %p146, %s145, 1
    %s148 = scalar_lea.vmem %s10, %s147
    %s149 = sld [smem:[#allocation3]]
    %v151 = vld [vmem:[%s1] sm:$0xff]
    %v152 = vlaneseq
    %v153 = vand.u32 %v152, 127
    %154 = vset.pattern.permute.xlu0 0
    %155 = vperm.xlu0 %154, %v151
    %v156 = vpop.permute.xlu0 %155
    %vm157 = vcmp.eq.s32.totalorder %v153, %v156
    %v158 = vsel %vm157, 1, 0
    %v159 = vcvt.s32.f32 %v158
    %v160 = vld [vmem:[#allocation4] sm:$0xff]
    %v161 = vld [vmem:[#allocation4 + $0x8] sm:$0xff]
    %v162 = vld [vmem:[#allocation4 + $0x10] sm:$0xff]
    %v163 = vld [vmem:[#allocation4 + $0x18] sm:$0xff]
    %v164 = vld [vmem:[#allocation4 + $0x20] sm:$0xff]
    %v165 = vld [vmem:[#allocation4 + $0x28] sm:$0xff]
    %v166 = vld [vmem:[#allocation4 + $0x30] sm:$0xff]
    %v167 = vld [vmem:[#allocation4 + $0x38] sm:$0xff]
    %v168 = vld [vmem:[#allocation4 + $0x40] sm:$0xff]
    %v169 = vld [vmem:[#allocation4 + $0x48] sm:$0xff]
    %v170 = vld [vmem:[#allocation4 + $0x50] sm:$0xff]
    %v171 = vld [vmem:[#allocation4 + $0x58] sm:$0xff]
    %v172 = vld [vmem:[#allocation4 + $0x60] sm:$0xff]
    %v173 = vld [vmem:[#allocation4 + $0x68] sm:$0xff]
    %v174 = vld [vmem:[#allocation4 + $0x70] sm:$0xff]
    %v175 = vld [vmem:[#allocation4 + $0x78] sm:$0xff]
    %v176 = vld [vmem:[%s4] sm:$0x1]
    %v178 = vlaneseq
    %v179 = vshrl.u32 %v178, 7
    %v180 = vsub.s32 0, %v179
    %v181 = vrot.slane %v176, %v180
    %183 = vmatprep.subr.mxu0 0.0
    %184 = vmatpush1.msra.mxu0 %v175
    %185 = vmatprep.subr.mxu0 0.0
    %186 = vmatpush1.msra.mxu0 %v174
    %187 = vmatprep.subr.mxu0 0.0
    %188 = vmatpush1.msra.mxu0 %v173
    %189 = vmatprep.subr.mxu0 0.0
    %190 = vmatpush1.msra.mxu0 %v172
    %191 = vmatprep.subr.mxu0 0.0
    %192 = vmatpush1.msra.mxu0 %v171
    %193 = vmatprep.subr.mxu0 0.0
    %194 = vmatpush1.msra.mxu0 %v170
    %195 = vmatprep.subr.mxu0 0.0
    %196 = vmatpush1.msra.mxu0 %v169
    %197 = vmatprep.subr.mxu0 0.0
    %198 = vmatpush1.msra.mxu0 %v168
    %199 = vmatprep.subr.mxu0 0.0
    %200 = vmatpush1.msra.mxu0 %v167
    %201 = vmatprep.subr.mxu0 0.0
    %202 = vmatpush1.msra.mxu0 %v166
    %203 = vmatprep.subr.mxu0 0.0
    %204 = vmatpush1.msra.mxu0 %v165
    %205 = vmatprep.subr.mxu0 0.0
    %206 = vmatpush1.msra.mxu0 %v164
    %207 = vmatprep.subr.mxu0 0.0
    %208 = vmatpush1.msra.mxu0 %v163
    %209 = vmatprep.subr.mxu0 0.0
    %210 = vmatpush1.msra.mxu0 %v162
    %211 = vmatprep.subr.mxu0 0.0
    %212 = vmatpush1.msra.mxu0 %v161
    %213 = vmatprep.subr.mxu0 0.0
    %214 = vmatpush1.msra.mxu0 %v160
    %215 = vmatprep.subr.mxu0 0.0
    %216 = vmatpush2.msra.mxu0 0.0
    %217 = vmatprep.subr.mxu0 0.0
    %218 = vmatpush2.msra.mxu0 0.0
    %219 = vmatprep.subr.mxu0 0.0
    %220 = vmatpush2.msra.mxu0 0.0
    %221 = vmatprep.subr.mxu0 0.0
    %222 = vmatpush2.msra.mxu0 0.0
    %223 = vmatprep.subr.mxu0 0.0
    %224 = vmatpush2.msra.mxu0 0.0
    %225 = vmatprep.subr.mxu0 0.0
    %226 = vmatpush2.msra.mxu0 0.0
    %227 = vmatprep.subr.mxu0 0.0
    %228 = vmatpush2.msra.mxu0 0.0
    %229 = vmatprep.subr.mxu0 0.0
    %230 = vmatpush2.msra.mxu0 0.0
    %231 = vmatprep.subr.mxu0 0.0
    %232 = vmatpush2.msra.mxu0 0.0
    %233 = vmatprep.subr.mxu0 0.0
    %234 = vmatpush2.msra.mxu0 0.0
    %235 = vmatprep.subr.mxu0 0.0
    %236 = vmatpush2.msra.mxu0 0.0
    %237 = vmatprep.subr.mxu0 0.0
    %238 = vmatpush2.msra.mxu0 0.0
    %239 = vmatprep.subr.mxu0 0.0
    %240 = vmatpush2.msra.mxu0 0.0
    %241 = vmatprep.subr.mxu0 0.0
    %242 = vmatpush2.msra.mxu0 0.0
    %243 = vmatprep.subr.mxu0 0.0
    %244 = vmatpush2.msra.mxu0 0.0
    %245 = vmatprep.subr.mxu0 0.0
    %246 = vmatpush2.msra.mxu0 0.0
    %247 = vmatprep.mubr.f32.mxu0 0.0
    %248 = vmatmul.mubr.f32.gmra.mxu0 %v159
    %v249 = vpop.f32.mrf.mxu0
    %v250 = vadd.f32 %v181, %v249
    %v251 = vpop.f32.mrf.mxu0
    %252 = vdwg.mxu0
    %v253 = vtanh.pop %v250
    %v254 = vld [vmem:[%s2] sm:$0xff]
    %256 = vset.pattern.permute.xlu0 0
    %257 = vperm.xlu0 %256, %v254
    %v258 = vpop.permute.xlu0 %257
    %v260 = vmul.f32 %v253, %v258
    %v261 = vpack.c.bf16 %v260, %v260
    %v262 = vld [vmem:[#allocation7] sm:$0xf]
    %v263 = vld [vmem:[#allocation7 + $0x4] sm:$0xf]
    %v264 = vld [vmem:[#allocation7 + $0x8] sm:$0xf]
    %v265 = vld [vmem:[#allocation7 + $0xc] sm:$0xf]
    %v266 = vld [vmem:[#allocation7 + $0x10] sm:$0xf]
    %v267 = vld [vmem:[#allocation7 + $0x14] sm:$0xf]
    %v268 = vld [vmem:[#allocation7 + $0x18] sm:$0xf]
    %v269 = vld [vmem:[#allocation7 + $0x1c] sm:$0xf]
    %v270 = vld [vmem:[#allocation7 + $0x20] sm:$0xf]
    %v271 = vld [vmem:[#allocation7 + $0x24] sm:$0xf]
    %v272 = vld [vmem:[#allocation7 + $0x28] sm:$0xf]
    %v273 = vld [vmem:[#allocation7 + $0x2c] sm:$0xf]
    %v274 = vld [vmem:[#allocation7 + $0x30] sm:$0xf]
    %v275 = vld [vmem:[#allocation7 + $0x34] sm:$0xf]
    %v276 = vld [vmem:[#allocation7 + $0x38] sm:$0xf]
    %v277 = vld [vmem:[#allocation7 + $0x3c] sm:$0xf]
    %v278 = vld [vmem:[%s136] sm:$0x1]
    %v280 = vlaneseq
    %v281 = vshrl.u32 %v280, 7
    %v282 = vsub.s32 0, %v281
    %v283 = vrot.slane %v278, %v282
    %v301 = vunpack.c.l.b16 %v262
    %v302 = vunpack.c.l.b16 %v263
    %v303 = vunpack.c.l.b16 %v264
    %v304 = vunpack.c.l.b16 %v265
    %v305 = vunpack.c.l.b16 %v266
    %v306 = vunpack.c.l.b16 %v267
    %v307 = vunpack.c.l.b16 %v268
    %v308 = vunpack.c.l.b16 %v269
    %v309 = vunpack.c.l.b16 %v270
    %v310 = vunpack.c.l.b16 %v271
    %v311 = vunpack.c.l.b16 %v272
    %v312 = vunpack.c.l.b16 %v273
    %v313 = vunpack.c.l.b16 %v274
    %v314 = vunpack.c.l.b16 %v275
    %v315 = vunpack.c.l.b16 %v276
    %v316 = vunpack.c.l.b16 %v277
    %v317 = vpack.c.b16 %v302, %v301
    %v318 = vpack.c.b16 %v304, %v303
    %v319 = vpack.c.b16 %v306, %v305
    %v320 = vpack.c.b16 %v308, %v307
    %v321 = vpack.c.b16 %v310, %v309
    %v322 = vpack.c.b16 %v312, %v311
    %v323 = vpack.c.b16 %v314, %v313
    %v324 = vpack.c.b16 %v316, %v315
    %333 = vmatprep.subr.bf16.mxu0 0
    %334 = vmatpush1.bf16.msra.mxu0 %v324
    %335 = vmatprep.subr.bf16.mxu0 0
    %336 = vmatpush1.bf16.msra.mxu0 %v323
    %337 = vmatprep.subr.bf16.mxu0 0
    %338 = vmatpush1.bf16.msra.mxu0 %v322
    %339 = vmatprep.subr.bf16.mxu0 0
    %340 = vmatpush1.bf16.msra.mxu0 %v321
    %341 = vmatprep.subr.bf16.mxu0 0
    %342 = vmatpush1.bf16.msra.mxu0 %v320
    %343 = vmatprep.subr.bf16.mxu0 0
    %344 = vmatpush1.bf16.msra.mxu0 %v319
    %345 = vmatprep.subr.bf16.mxu0 0
    %346 = vmatpush1.bf16.msra.mxu0 %v318
    %347 = vmatprep.subr.bf16.mxu0 0
    %348 = vmatpush1.bf16.msra.mxu0 %v317
    %349 = vmatprep.subr.bf16.mxu0 0
    %350 = vmatpush2.bf16.msra.mxu0 0
    %351 = vmatprep.subr.bf16.mxu0 0
    %352 = vmatpush2.bf16.msra.mxu0 0
    %353 = vmatprep.subr.bf16.mxu0 0
    %354 = vmatpush2.bf16.msra.mxu0 0
    %355 = vmatprep.subr.bf16.mxu0 0
    %356 = vmatpush2.bf16.msra.mxu0 0
    %357 = vmatprep.subr.bf16.mxu0 0
    %358 = vmatpush2.bf16.msra.mxu0 0
    %359 = vmatprep.subr.bf16.mxu0 0
    %360 = vmatpush2.bf16.msra.mxu0 0
    %361 = vmatprep.subr.bf16.mxu0 0
    %362 = vmatpush2.bf16.msra.mxu0 0
    %363 = vmatprep.subr.bf16.mxu0 0
    %364 = vmatpush2.bf16.msra.mxu0 0
    %365 = vmatprep.mubr.bf16.mxu0 0
    %366 = vmatmul.mubr.bf16.gmra.mxu0 %v261
    %v367 = vpop.f32.mrf.mxu0
    %v368 = vadd.f32 %v283, %v367
    %v369 = vpop.f32.mrf.mxu0
    %v370 = vpop.f32.mrf.mxu0
    %v371 = vpop.f32.mrf.mxu0
    %372 = vdwg.mxu0
    %v373 = vmax.f32 %v368, 0.0
    %v374 = vpack.c.bf16 %v373, %v373
    %v375 = vld [vmem:[#allocation9] sm:$0xf]
    %v376 = vld [vmem:[#allocation9 + $0x4] sm:$0xf]
    %v377 = vld [vmem:[#allocation9 + $0x8] sm:$0xf]
    %v378 = vld [vmem:[#allocation9 + $0xc] sm:$0xf]
    %v379 = vld [vmem:[#allocation9 + $0x10] sm:$0xf]
    %v380 = vld [vmem:[#allocation9 + $0x14] sm:$0xf]
    %v381 = vld [vmem:[#allocation9 + $0x18] sm:$0xf]
    %v382 = vld [vmem:[#allocation9 + $0x1c] sm:$0xf]
    %v383 = vld [vmem:[#allocation9 + $0x20] sm:$0xf]
    %v384 = vld [vmem:[#allocation9 + $0x24] sm:$0xf]
    %v385 = vld [vmem:[#allocation9 + $0x28] sm:$0xf]
    %v386 = vld [vmem:[#allocation9 + $0x2c] sm:$0xf]
    %v387 = vld [vmem:[#allocation9 + $0x30] sm:$0xf]
    %v388 = vld [vmem:[#allocation9 + $0x34] sm:$0xf]
    %v389 = vld [vmem:[#allocation9 + $0x38] sm:$0xf]
    %v390 = vld [vmem:[#allocation9 + $0x3c] sm:$0xf]
    %v391 = vld [vmem:[%s142] sm:$0x1]
    %v393 = vlaneseq
    %v394 = vshrl.u32 %v393, 7
    %v395 = vsub.s32 0, %v394
    %v396 = vrot.slane %v391, %v395
    %v414 = vunpack.c.l.b16 %v375
    %v415 = vunpack.c.l.b16 %v376
    %v416 = vunpack.c.l.b16 %v377
    %v417 = vunpack.c.l.b16 %v378
    %v418 = vunpack.c.l.b16 %v379
    %v419 = vunpack.c.l.b16 %v380
    %v420 = vunpack.c.l.b16 %v381
    %v421 = vunpack.c.l.b16 %v382
    %v422 = vunpack.c.l.b16 %v383
    %v423 = vunpack.c.l.b16 %v384
    %v424 = vunpack.c.l.b16 %v385
    %v425 = vunpack.c.l.b16 %v386
    %v426 = vunpack.c.l.b16 %v387
    %v427 = vunpack.c.l.b16 %v388
    %v428 = vunpack.c.l.b16 %v389
    %v429 = vunpack.c.l.b16 %v390
    %v430 = vpack.c.b16 %v415, %v414
    %v431 = vpack.c.b16 %v417, %v416
    %v432 = vpack.c.b16 %v419, %v418
    %v433 = vpack.c.b16 %v421, %v420
    %v434 = vpack.c.b16 %v423, %v422
    %v435 = vpack.c.b16 %v425, %v424
    %v436 = vpack.c.b16 %v427, %v426
    %v437 = vpack.c.b16 %v429, %v428
    %446 = vmatprep.subr.bf16.mxu0 0
    %447 = vmatpush1.bf16.msra.mxu0 %v437
    %448 = vmatprep.subr.bf16.mxu0 0
    %449 = vmatpush1.bf16.msra.mxu0 %v436
    %450 = vmatprep.subr.bf16.mxu0 0
    %451 = vmatpush1.bf16.msra.mxu0 %v435
    %452 = vmatprep.subr.bf16.mxu0 0
    %453 = vmatpush1.bf16.msra.mxu0 %v434
    %454 = vmatprep.subr.bf16.mxu0 0
    %455 = vmatpush1.bf16.msra.mxu0 %v433
    %456 = vmatprep.subr.bf16.mxu0 0
    %457 = vmatpush1.bf16.msra.mxu0 %v432
    %458 = vmatprep.subr.bf16.mxu0 0
    %459 = vmatpush1.bf16.msra.mxu0 %v431
    %460 = vmatprep.subr.bf16.mxu0 0
    %461 = vmatpush1.bf16.msra.mxu0 %v430
    %462 = vmatprep.subr.bf16.mxu0 0
    %463 = vmatpush2.bf16.msra.mxu0 0
    %464 = vmatprep.subr.bf16.mxu0 0
    %465 = vmatpush2.bf16.msra.mxu0 0
    %466 = vmatprep.subr.bf16.mxu0 0
    %467 = vmatpush2.bf16.msra.mxu0 0
    %468 = vmatprep.subr.bf16.mxu0 0
    %469 = vmatpush2.bf16.msra.mxu0 0
    %470 = vmatprep.subr.bf16.mxu0 0
    %471 = vmatpush2.bf16.msra.mxu0 0
    %472 = vmatprep.subr.bf16.mxu0 0
    %473 = vmatpush2.bf16.msra.mxu0 0
    %474 = vmatprep.subr.bf16.mxu0 0
    %475 = vmatpush2.bf16.msra.mxu0 0
    %476 = vmatprep.subr.bf16.mxu0 0
    %477 = vmatpush2.bf16.msra.mxu0 0
    %478 = vmatprep.mubr.bf16.mxu0 0
    %479 = vmatmul.mubr.bf16.gmra.mxu0 %v374
    %v480 = vpop.f32.mrf.mxu0
    %v481 = vadd.f32 %v396, %v480
    %v482 = vpop.f32.mrf.mxu0
    %v483 = vpop.f32.mrf.mxu0
    %v484 = vpop.f32.mrf.mxu0
    %485 = vdwg.mxu0
    %v486 = vadd.f32 %v260, %v481
    %v487 = vpack.c.bf16 %v486, %v486
    %v488 = vld [vmem:[#allocation10] sm:$0xf]
    %v489 = vld [vmem:[#allocation10 + $0x4] sm:$0xf]
    %v490 = vld [vmem:[#allocation10 + $0x8] sm:$0xf]
    %v491 = vld [vmem:[#allocation10 + $0xc] sm:$0xf]
    %v492 = vld [vmem:[#allocation10 + $0x10] sm:$0xf]
    %v493 = vld [vmem:[#allocation10 + $0x14] sm:$0xf]
    %v494 = vld [vmem:[#allocation10 + $0x18] sm:$0xf]
    %v495 = vld [vmem:[#allocation10 + $0x1c] sm:$0xf]
    %v496 = vld [vmem:[#allocation10 + $0x20] sm:$0xf]
    %v497 = vld [vmem:[#allocation10 + $0x24] sm:$0xf]
    %v498 = vld [vmem:[#allocation10 + $0x28] sm:$0xf]
    %v499 = vld [vmem:[#allocation10 + $0x2c] sm:$0xf]
    %v500 = vld [vmem:[#allocation10 + $0x30] sm:$0xf]
    %v501 = vld [vmem:[#allocation10 + $0x34] sm:$0xf]
    %v502 = vld [vmem:[#allocation10 + $0x38] sm:$0xf]
    %v503 = vld [vmem:[#allocation10 + $0x3c] sm:$0xf]
    %v504 = vld [vmem:[%s148] sm:$0x1]
    %v506 = vlaneseq
    %v507 = vshrl.u32 %v506, 7
    %v508 = vsub.s32 0, %v507
    %v509 = vrot.slane %v504, %v508
    %v527 = vunpack.c.l.b16 %v488
    %v528 = vunpack.c.l.b16 %v489
    %v529 = vunpack.c.l.b16 %v490
    %v530 = vunpack.c.l.b16 %v491
    %v531 = vunpack.c.l.b16 %v492
    %v532 = vunpack.c.l.b16 %v493
    %v533 = vunpack.c.l.b16 %v494
    %v534 = vunpack.c.l.b16 %v495
    %v535 = vunpack.c.l.b16 %v496
    %v536 = vunpack.c.l.b16 %v497
    %v537 = vunpack.c.l.b16 %v498
    %v538 = vunpack.c.l.b16 %v499
    %v539 = vunpack.c.l.b16 %v500
    %v540 = vunpack.c.l.b16 %v501
    %v541 = vunpack.c.l.b16 %v502
    %v542 = vunpack.c.l.b16 %v503
    %v543 = vpack.c.b16 %v528, %v527
    %v544 = vpack.c.b16 %v530, %v529
    %v545 = vpack.c.b16 %v532, %v531
    %v546 = vpack.c.b16 %v534, %v533
    %v547 = vpack.c.b16 %v536, %v535
    %v548 = vpack.c.b16 %v538, %v537
    %v549 = vpack.c.b16 %v540, %v539
    %v550 = vpack.c.b16 %v542, %v541
    %559 = vmatprep.subr.bf16.mxu0 0
    %560 = vmatpush1.bf16.msra.mxu0 %v550
    %561 = vmatprep.subr.bf16.mxu0 0
    %562 = vmatpush1.bf16.msra.mxu0 %v549
    %563 = vmatprep.subr.bf16.mxu0 0
    %564 = vmatpush1.bf16.msra.mxu0 %v548
    %565 = vmatprep.subr.bf16.mxu0 0
    %566 = vmatpush1.bf16.msra.mxu0 %v547
    %567 = vmatprep.subr.bf16.mxu0 0
    %568 = vmatpush1.bf16.msra.mxu0 %v546
    %569 = vmatprep.subr.bf16.mxu0 0
    %570 = vmatpush1.bf16.msra.mxu0 %v545
    %571 = vmatprep.subr.bf16.mxu0 0
    %572 = vmatpush1.bf16.msra.mxu0 %v544
    %573 = vmatprep.subr.bf16.mxu0 0
    %574 = vmatpush1.bf16.msra.mxu0 %v543
    %575 = vmatprep.subr.bf16.mxu0 0
    %576 = vmatpush2.bf16.msra.mxu0 0
    %577 = vmatprep.subr.bf16.mxu0 0
    %578 = vmatpush2.bf16.msra.mxu0 0
    %579 = vmatprep.subr.bf16.mxu0 0
    %580 = vmatpush2.bf16.msra.mxu0 0
    %581 = vmatprep.subr.bf16.mxu0 0
    %582 = vmatpush2.bf16.msra.mxu0 0
    %583 = vmatprep.subr.bf16.mxu0 0
    %584 = vmatpush2.bf16.msra.mxu0 0
    %585 = vmatprep.subr.bf16.mxu0 0
    %586 = vmatpush2.bf16.msra.mxu0 0
    %587 = vmatprep.subr.bf16.mxu0 0
    %588 = vmatpush2.bf16.msra.mxu0 0
    %589 = vmatprep.subr.bf16.mxu0 0
    %590 = vmatpush2.bf16.msra.mxu0 0
    %591 = vmatprep.mubr.bf16.mxu0 0
    %592 = vmatmul.mubr.bf16.gmra.mxu0 %v487
    %v593 = vpop.f32.mrf.mxu0
    %v594 = vadd.f32 %v509, %v593
    %v595 = vpop.f32.mrf.mxu0
    %v596 = vpop.f32.mrf.mxu0
    %v597 = vpop.f32.mrf.mxu0
    %598 = vdwg.mxu0
    %v599 = vpack.c.bf16 %v594, %v594
    %600 = vst [vmem:[#allocation12] sm:$0xf] %v599
    // Predicated region
    $region58: #{tpu_custom_call.1} parent=1 // pred_check
      _
    $region59: #{tpu_custom_call.1} parent=1 // pred_check_branch
      %602 = sbr.rel (0) target = $region61
    $region60: #{tpu_custom_call.1} parent=1 // pred_region
      %s604 = ssub.s32 64, 64
      %605 = vsyncadd [#allocation6], %s604
      %s607 = sshll.u32 [#allocation12], 4
      %s608 = int_to_ptr.vmem [resolvable:$true] %s607
      %610 = dma.vmem_to_hbm [thread:$0]  %s608, 64, %s11, [#allocation6]
    $region61: #{tpu_custom_call.1} parent=1 // pred_fallthru
      _
    // Predicated region
    $region62: #{tpu_custom_call.1} parent=1 // pred_check
      _
    $region63: #{tpu_custom_call.1} parent=1 // pred_check_branch
      %612 = sbr.rel (0) target = $region65
    $region64: #{tpu_custom_call.1} parent=1 // pred_region
      %613 = dma.done [#allocation6], 64
    $region65: #{tpu_custom_call.1} parent=1 // pred_fallthru
      _
    %614 = vsyncpa [#allocation5], 1
    %615 = vsyncpa [#allocation8], 1
    %616 = vsyncpa [#allocation11], 1
    %617 = vsyncpa [#allocation6], 1

</llo_original>
